<compile_context>
chip_gen: v7x
topology: tpu7x:2x2x1
jax: 0.10.0
libtpu: 0.0.40
codegen_flags: <defaults>
</compile_context>

<pallas_src>
import functools

import numpy as np
import jax
import jax.numpy as jnp
from jax.experimental import pallas as pl
from jax.experimental.pallas import tpu as pltpu


def _cdiv(a, b):
    return -(-a // b)


# ---------------------------------------------------------------------------
# Kernels
# ---------------------------------------------------------------------------
def _agg_small_kernel(x_ref, o_ref, *, scale):
    """Whole array in one VMEM block: x (B, N, F) -> o (B, F)."""
    xf = x_ref[...].astype(jnp.float32)
    o_ref[...] = (jnp.sum(xf, axis=1) * scale).astype(o_ref.dtype)


def _agg_tiled_kernel(x_ref, o_ref, acc_ref, *, scale, n_total, tn, mask_n):
    """Tiled reduction: x block (tb, tn, tf) accumulated into acc (tb, tf)."""
    k = pl.program_id(2)  # reduction axis (last grid axis)

    @pl.when(k == 0)
    def _():
        acc_ref[...] = jnp.zeros_like(acc_ref)

    x = x_ref[...].astype(jnp.float32)
    if mask_n:
        # Ragged last reduction tile: zero the out-of-range rows before summing.
        row = jax.lax.broadcasted_iota(jnp.int32, x.shape, 1)
        x = jnp.where(k * tn + row < n_total, x, 0.0)
    acc_ref[...] += jnp.sum(x, axis=1)

    @pl.when(k == pl.num_programs(2) - 1)
    def _():
        o_ref[...] = (acc_ref[...] * scale).astype(o_ref.dtype)


# ---------------------------------------------------------------------------
# Chip-aware sizing helpers
# ---------------------------------------------------------------------------
def _vmem_capacity_bytes():
    try:
        info = pltpu.get_tpu_info()
        cap = getattr(info, "vmem_capacity_bytes", None)
        if cap:
            return int(cap)
    except Exception:
        pass
    return 64 * 1024 * 1024  # conservative: v7x per-TensorCore VMEM


def _chip_params():
    cap = _vmem_capacity_bytes()
    # Block byte budget (f32-equivalent): ~10.6 MiB on 64 MiB VMEM, 16 MiB on 128 MiB.
    budget = max(4 << 20, min(16 << 20, cap // 6))
    # Single-block fast-path limit (raw + f32 working copy): 8 MiB / 16 MiB.
    small = max(2 << 20, min(16 << 20, cap // 8))
    return cap, budget, small


def _select_tiles(B, N, F, itemsize, budget_bytes):
    """Pick (tb, tf, tn) tiles and grid sizes for the tiled reduction."""
    pack = 8 * max(1, 4 // max(1, itemsize))        # f32:8, bf16:16, int8:32
    max_elems = max(pack * 128, budget_bytes // 4)  # budget in f32-equivalent elems

    # Batch tile: full B when small, else 8 (keeps (tb, tf) output stores unmasked).
    tb = B if B <= 8 else 8

    # Feature tile: prefer full F (contiguous per-row DMA); else lane-dense 128-multiple.
    if tb * pack * F <= max_elems or F <= 128:
        tf = F
    else:
        tf = max(128, (max_elems // (tb * pack)) // 128 * 128)
        tf = min(tf, max(128, (F // 128) * 128))
    grid_f = _cdiv(F, tf)

    # Ensure >=2 iterations on a "parallel" axis when B==1-tile and F fits one tile,
    # so v7x's two TensorCores both get work (free on a mem-bound kernel).
    if tb == B and grid_f == 1 and tf == F and F >= 256:
        half = (((F + 1) // 2) + 127) // 128 * 128
        if half < F:
            tf = half
            grid_f = _cdiv(F, tf)

    # Reduction tile: fill the block budget with packed-sublane-aligned rows.
    rows_max = max(pack, (max_elems // (tb * tf)) // pack * pack)
    tn = N if N <= rows_max else rows_max
    grid_n = _cdiv(N, tn)

    # If the whole reduction fits in one step, use leftover budget for more batches.
    if tn == N and B > tb:
        tb_fit = max_elems // max(1, N * tf)
        if tb_fit >= B:
            tb = B
        elif tb_fit >= 2 * tb:
            tb = (tb_fit // 8) * 8
    grid_b = _cdiv(B, tb)

    return tb, tf, tn, grid_b, grid_f, grid_n


# ---------------------------------------------------------------------------
# Wrapper: Aggregate.forward
# ---------------------------------------------------------------------------
def aggregate_forward(x, aggregate_type="average", *,
                      _budget_bytes=None, _small_limit_bytes=None):
    """Pallas implementation of Aggregate.forward: reduce over dim=1."""
    if x.ndim < 2:
        raise ValueError("Aggregate expects an input with at least 2 dims")

    B, N = x.shape[0], x.shape[1]
    trailing = x.shape[2:]
    F = int(np.prod(trailing)) if trailing else 1
    x3 = x.reshape(B, N, F)

    scale = (1.0 / float(N)) if aggregate_type == "average" else 1.0
    itemsize = jnp.dtype(x3.dtype).itemsize
    elems = B * N * F

    cap, budget, small_limit = _chip_params()
    if _budget_bytes is not None:
        budget = int(_budget_bytes)
    if _small_limit_bytes is not None:
        small_limit = int(_small_limit_bytes)

    if elems * (itemsize + 4) <= small_limit:
        # --- Single full-array block: no per-step pipeline overhead. ---
        in_bytes = elems * itemsize
        out_bytes = B * F * (itemsize + 4)
        need = 2 * in_bytes + elems * 4 + 2 * out_bytes + (4 << 20)
        vmem_limit = int(min(cap - (4 << 20), max(need, 24 << 20)))
        out = pl.pallas_call(
            functools.partial(_agg_small_kernel, scale=scale),
            out_shape=jax.ShapeDtypeStruct((B, F), x3.dtype),
            grid_spec=pltpu.PrefetchScalarGridSpec(
                num_scalar_prefetch=0,
                grid=(1,),
                in_specs=[pl.BlockSpec((B, N, F), lambda i: (0, 0, 0))],
                out_specs=pl.BlockSpec((B, F), lambda i: (0, 0)),
            ),
            compiler_params=pltpu.CompilerParams(
                dimension_semantics=("arbitrary",),
                vmem_limit_bytes=vmem_limit,
            ),
        )(x3)
    else:
        # --- Tiled path: generation-sized blocks, cdiv grids + masking. ---
        tb, tf, tn, grid_b, grid_f, grid_n = _select_tiles(B, N, F, itemsize, budget)
        mask_n = (N % tn) != 0

        in_block = tb * tn * tf * itemsize
        in_block_f32 = tb * tn * tf * 4
        out_block = tb * tf * itemsize
        acc_block = tb * tf * 4
        need = 2 * in_block + in_block_f32 + 2 * out_block + acc_block + (4 << 20)
        vmem_limit = int(min(cap - (4 << 20), max(need, 16 << 20)))

        out = pl.pallas_call(
            functools.partial(_agg_tiled_kernel, scale=scale,
                              n_total=N, tn=tn, mask_n=mask_n),
            out_shape=jax.ShapeDtypeStruct((B, F), x3.dtype),
            grid_spec=pltpu.PrefetchScalarGridSpec(
                num_scalar_prefetch=0,
                grid=(grid_b, grid_f, grid_n),
                in_specs=[pl.BlockSpec((tb, tn, tf), lambda b, f, k: (b, k, f))],
                out_specs=pl.BlockSpec((tb, tf), lambda b, f, k: (b, f)),
                scratch_shapes=[pltpu.VMEM((tb, tf), jnp.float32)],
            ),
            compiler_params=pltpu.CompilerParams(
                dimension_semantics=("parallel", "parallel", "arbitrary"),
                vmem_limit_bytes=vmem_limit,
            ),
        )(x3)

    return out.reshape((B,) + trailing)


if __name__ == "__main__":
    key = jax.random.PRNGKey(0)
    k1, k2, k3, k4 = jax.random.split(key, 4)

    # 1) MPNN-style node features: (batch=2, num_nodes=8, hidden=32) -> small path.
    x = jax.random.normal(k1, (2, 8, 32), dtype=jnp.float32)
    y = aggregate_forward(x, "average")
    jax.block_until_ready(y)
    assert y.shape == (2, 32) and y.dtype == x.dtype
    assert bool(jnp.allclose(y, jnp.mean(x, axis=1), atol=1e-5, rtol=1e-5))
    ys = aggregate_forward(x, "sum")
    jax.block_until_ready(ys)
    assert bool(jnp.allclose(ys, jnp.sum(x, axis=1), atol=1e-5, rtol=1e-5))

    # 2) Trailing dims: (B, N, C, D) -> (B, C, D).
    x4 = jax.random.normal(k2, (2, 5, 4, 8), dtype=jnp.float32)
    y4 = aggregate_forward(x4, "average")
    jax.block_until_ready(y4)
    assert y4.shape == (2, 4, 8)
    assert bool(jnp.allclose(y4, jnp.mean(x4, axis=1), atol=1e-5, rtol=1e-5))

    # 3) Exercise the tiled path with tiny forced tile budgets: ragged batch tile
    #    (B=9, tb=8), ragged feature tile (F=384, tf=256), masked reduction (N=20, tn=8).
    x5 = jax.random.normal(k3, (9, 20, 384), dtype=jnp.float32)
    y5 = aggregate_forward(x5, "average", _budget_bytes=64 * 1024, _small_limit_bytes=0)
    jax.block_until_ready(y5)
    assert bool(jnp.allclose(y5, jnp.mean(x5, axis=1), atol=1e-4, rtol=1e-4))
    y5s = aggregate_forward(x5, "sum", _budget_bytes=64 * 1024, _small_limit_bytes=0)
    jax.block_until_ready(y5s)
    assert bool(jnp.allclose(y5s, jnp.sum(x5, axis=1), atol=1e-4, rtol=1e-4))

    # 4) Tiled path with full-N reduction and the feature split (2 parallel tiles).
    x6 = jax.random.normal(k4, (2, 33, 512), dtype=jnp.float32)
    y6 = aggregate_forward(x6, "average", _small_limit_bytes=0)
    jax.block_until_ready(y6)
    assert bool(jnp.allclose(y6, jnp.mean(x6, axis=1), atol=1e-4, rtol=1e-4))

    print("KERNEL_OK")
</pallas_src>

<mosaic_0001>
module attributes {stable_mosaic.version = 11 : i64} {
  func.func @_agg_small_kernel(%arg0: i32, %arg1: memref<2x8x32xf32, #tpu.memory_space<vmem>>, %arg2: memref<2x32xf32, #tpu.memory_space<vmem>>) attributes {dimension_semantics = [#tpu.dimension_semantics<arbitrary>], iteration_bounds = array<i64: 1>, scalar_prefetch = 0 : i64, scratch_operands = 0 : i64, tpu.core_type = #tpu.core_type<tc>, window_params = [{pipeline_mode = #tpu.pipeline_mode<synchronous>, transform_indices = @transform_0, window_bounds = array<i64: 2, 8, 32>}, {pipeline_mode = #tpu.pipeline_mode<synchronous>, transform_indices = @transform_1, window_bounds = array<i64: 2, 32>}]} {
    %c0 = arith.constant 0 : index
    %c0_0 = arith.constant 0 : index
    %c0_1 = arith.constant 0 : index
    %0 = vector.load %arg1[%c0, %c0_0, %c0_1] : memref<2x8x32xf32, #tpu.memory_space<vmem>>, vector<2x8x32xf32>
    %cst = arith.constant dense<0.000000e+00> : vector<2x32xf32>
    %1 = vector.multi_reduction <add>, %0, %cst [1] : vector<2x8x32xf32> to vector<2x32xf32>
    %cst_2 = arith.constant 1.250000e-01 : f32
    %2 = vector.broadcast %cst_2 : f32 to vector<2x32xf32>
    %3 = arith.mulf %1, %2 : vector<2x32xf32>
    %c0_3 = arith.constant 0 : index
    %c0_4 = arith.constant 0 : index
    %4 = vector.load %arg2[%c0_3, %c0_4] : memref<2x32xf32, #tpu.memory_space<vmem>>, vector<2x32xf32>
    tpu.vector_store %arg2[%c0_3, %c0_4], %3 {strides = array<i32>} : memref<2x32xf32, #tpu.memory_space<vmem>>, vector<2x32xf32>,
    return
  }
  func.func @transform_0(%arg0: i32) -> (i32, i32, i32) {
    %c0_i32 = arith.constant 0 : i32
    %c0_i32_0 = arith.constant 0 : i32
    %c0_i32_1 = arith.constant 0 : i32
    %c0_i32_2 = arith.constant 0 : i32
    return %c0_i32, %c0_i32_0, %c0_i32_1 : i32, i32, i32
  }
  func.func @transform_1(%arg0: i32) -> (i32, i32) {
    %c0_i32 = arith.constant 0 : i32
    %c0_i32_0 = arith.constant 0 : i32
    %c0_i32_1 = arith.constant 0 : i32
    return %c0_i32, %c0_i32_0 : i32, i32
  }
}

</mosaic_0001>

<llo_original>
// kernel: tpu_custom_call.1
$region0: #{tpu_custom_call.1}
  #allocation0 [shape = 'u32[]', space=smem, size = 0x4, offset = 0x4, fixed_abs, tag = 'smem constant byte address 0x4 - core index']
  #allocation1 [shape = 'u32[144,128]{1,0:T(1,128)}', space=vmem, size = 0x12000, scoped, tag = 'internal scratch']
  %s0 = inlined_call_operand.hbm [shape: f32[2,8,32], index: 0, kind: input, shape index: {}]
  %s1 = inlined_call_operand.hbm [shape: f32[2,32], index: 1, kind: output, shape index: {}]
  %s2 = sld [smem:[#allocation0]]
  $region18: #{tpu_custom_call.1} parent=0
    _
  %s4 = ssub.s32 1, %s2
  %s5 = scalar_select 0, %s4, %s2
  $region1: #{tpu_custom_call.1} parent=0
    #allocation2 [shape = 'u8[8192]{0}', space=vmem, size = 0x2000, scoped, tag = 'input window, operand 0, single buffered']
    #allocation3 [shape = 's32[1]{0}', space=sflag, size = 0x4, scoped, tag = 'scoped memory for tpu_custom_call.1']
    #allocation4 [shape = 's32[1]{0}', space=sflag, size = 0x4, scoped, tag = 'scoped memory for tpu_custom_call.1']
    #allocation5 [shape = 'u8[1024]{0}', space=vmem, size = 0x400, scoped, tag = 'output window, operand 0, single buffered']
    %6 = vsyncpa [#allocation3], 0
    %7 = vsyncpa [#allocation4], 0
    // Predicated region
    $region2: #{tpu_custom_call.1} parent=1 // pred_check
      _
    $region3: #{tpu_custom_call.1} parent=1 // pred_check_branch
      %9 = sbr.rel (0) target = $region5
    $region4: #{tpu_custom_call.1} parent=1 // pred_region
      %s11 = ssub.s32 256, 256
      %12 = vsyncadd [#allocation3], %s11
      %s13 = sshll.u32 [#allocation2], 4
      %s14 = int_to_ptr.vmem [resolvable:$true] %s13
      %19 = dma.hbm_to_vmem [thread:$0]  %s0, 256, %s14, [#allocation3], 128, 128, 8
    $region5: #{tpu_custom_call.1} parent=1 // pred_fallthru
      _
    // Predicated region
    $region6: #{tpu_custom_call.1} parent=1 // pred_check
      _
    $region7: #{tpu_custom_call.1} parent=1 // pred_check_branch
      %21 = sbr.rel (0) target = $region9
    $region8: #{tpu_custom_call.1} parent=1 // pred_region
      %22 = dma.done [#allocation3], 256
    $region9: #{tpu_custom_call.1} parent=1 // pred_fallthru
      _
    %v23 = vld [vmem:[#allocation2] sm:$0xff]
    %v24 = vld [vmem:[#allocation2 + $0x8] sm:$0xff]
    %vm25 = vcmask 261120
    %v26 = vsel %vm25, %v23, 0.0
    %v27 = vrot.slane %v26, 4
    %v28 = vadd.f32 %v26, %v27
    %v29 = vrot.slane %v28, 2
    %v30 = vadd.f32 %v28, %v29
    %v31 = vrot.slane %v30, 1
    %v32 = vadd.f32 %v30, %v31
    %v33 = vsel %vm25, %v24, 0.0
    %v34 = vrot.slane %v33, 4
    %v35 = vadd.f32 %v33, %v34
    %v36 = vrot.slane %v35, 2
    %v37 = vadd.f32 %v35, %v36
    %v38 = vrot.slane %v37, 1
    %v39 = vadd.f32 %v37, %v38
    %v40 = vmul.f32 %v32, 0.125
    %v41 = vmul.f32 %v39, 0.125
    %vm44 = vcmask 1041409
    %v45 = vsel %vm44, %v41, %v40
    %vm47 = vcmask 254976
    %48 = vst.msk [vmem:[#allocation5] sm:$0x3] %vm47, %v45
    // Predicated region
    $region10: #{tpu_custom_call.1} parent=1 // pred_check
      _
    $region11: #{tpu_custom_call.1} parent=1 // pred_check_branch
      %50 = sbr.rel (0) target = $region13
    $region12: #{tpu_custom_call.1} parent=1 // pred_region
      %s52 = ssub.s32 32, 32
      %53 = vsyncadd [#allocation4], %s52
      %s55 = sshll.u32 [#allocation5], 4
      %s56 = int_to_ptr.vmem [resolvable:$true] %s55
      %58 = dma.vmem_to_hbm [thread:$0]  %s56, 32, %s1, [#allocation4]
    $region13: #{tpu_custom_call.1} parent=1 // pred_fallthru
      _
    // Predicated region
    $region14: #{tpu_custom_call.1} parent=1 // pred_check
      _
    $region15: #{tpu_custom_call.1} parent=1 // pred_check_branch
      %60 = sbr.rel (0) target = $region17
    $region16: #{tpu_custom_call.1} parent=1 // pred_region
      %61 = dma.done [#allocation4], 32
    $region17: #{tpu_custom_call.1} parent=1 // pred_fallthru
      _
    %62 = vsyncpa [#allocation3], 1
    %63 = vsyncpa [#allocation4], 1

</llo_original>
